<compile_context>
chip_gen: v7x
topology: tpu7x:2x2x1
jax: 0.10.0
libtpu: 0.0.40
codegen_flags: <defaults>
</compile_context>

<pallas_src>
import math

import jax
import jax.numpy as jnp
from jax.experimental import pallas as pl
from jax.experimental.pallas import tpu as pltpu


def _round_up(x, m):
    return ((x + m - 1) // m) * m


def conv1d_fused_kernel(xh_ref, w_ref, b_ref, out_ref):
    """Fused reflect-pad conv1d (in_channels=1) writing the final (L, N*O) layout.

    xh_ref : (1, bn, bl + K - 1) f32  VMEM -- N on sublanes, padded-L (+halo) on lanes
    w_ref  : (K, O_pad, 1)       f32  VMEM -- taps, channel on sublanes
    b_ref  : (O_pad, 1)          f32  VMEM -- bias
    out_ref: (bl, bn * O_pad)    f32  VMEM -- lane-dense fused output tile
    """
    K = w_ref.shape[0]
    O = w_ref.shape[1]
    bl = out_ref.shape[0]

    xh = xh_ref[0]                                    # (bn, blh)
    bn = xh.shape[0]

    # acc[n, o, l] = b[o] + sum_k xh[n, l + k] * w[k, o]
    # Tap shifts are static lane slices of the halo tile (no taps array in HBM);
    # the per-channel weight is a sublane/lane broadcast (VPU FMAs only).
    acc = xh[:, 0:bl][:, None, :] * w_ref[0][None, :, :] + b_ref[...][None, :, :]
    for k in range(1, K):                             # K is tiny; fully unrolled
        acc = acc + xh[:, k:k + bl][:, None, :] * w_ref[k][None, :, :]

    # (bn, O_pad, bl) -> (bn*O_pad, bl) is layout-free (O_pad is a multiple of 8),
    # then a single 2-D transpose (XLU) puts L on sublanes / fused (n, o) on lanes,
    # so the store is full-width unmasked and the HBM array is already (L, N*O).
    yt = acc.reshape(bn * O, bl)
    out_ref[...] = yt.T.astype(out_ref.dtype)


def conv1d_layer(x, weight, bias, *, block_l=512, block_n=128):
    """Pallas-backed equivalent of Conv1DLayer.forward.

    x:      (L, N, 1) float32   (seq-first, as the PyTorch module expects)
    weight: (O, 1, K) float32   (torch Conv1d layout)
    bias:   (O,)      float32
    returns (L, N, O) float32
    """
    L, N, c = x.shape
    O, c_in, K = weight.shape
    assert c == 1 and c_in == 1, "Conv1DLayer uses in_channels=1"
    assert K % 2 == 1, "reflect-padded 'same' conv path implemented for odd kernel_size"
    pad = (K - 1) // 2
    assert L > pad, "reflect padding requires L > (K-1)//2"

    f32 = jnp.float32

    # ---- tiling ---------------------------------------------------------------
    O_pad = max(8, _round_up(O, 8))                      # sublane-friendly channel pad
    lane_q = 128 // math.gcd(O_pad, 128)                 # bn*O_pad must be a mult of 128
    q = lane_q * 8 // math.gcd(lane_q, 8)                # ... and bn a multiple of 8
    N_pad = _round_up(N, q)

    bn = q
    cap = min(N_pad, max(q, (block_n // q) * q))
    for cand in range(cap, q - 1, -q):
        if N_pad % cand == 0:
            bn = cand
            break

    bl = max(128, min(_round_up(block_l, 128), _round_up(L, 128)))
    L_pad = _round_up(L, bl)
    # v7x has 2 TensorCores: make sure a 'parallel' axis has >= 2 blocks when possible.
    if (N_pad // bn) * (L_pad // bl) < 2 and bl >= 256:
        bl //= 2
        L_pad = _round_up(L, bl)

    nNb = N_pad // bn
    nLb = L_pad // bl
    blh = bl + K - 1

    # ---- XLA glue (input-sized only): squeeze, reflect-pad, zero-pad, halo windows --
    x2 = x[:, :, 0].astype(f32)                                       # (L, N)
    xr = jnp.pad(x2, ((pad, pad), (0, 0)), mode="reflect")            # (L+K-1, N)
    xr = jnp.pad(xr, ((0, L_pad - L), (0, N_pad - N)))                # (L_pad+K-1, N_pad)
    win = jnp.arange(nLb)[:, None] * bl + jnp.arange(blh)[None, :]    # (nLb, blh)
    xh = jnp.swapaxes(xr[win], 1, 2)                                  # (nLb, N_pad, blh)

    # taps / bias, zero-padded to O_pad, as tiny columns for in-kernel broadcasts
    w_ko = jnp.transpose(weight[:, 0, :], (1, 0)).astype(f32)         # (K, O)
    w_ko = jnp.pad(w_ko, ((0, 0), (0, O_pad - O)))[:, :, None]        # (K, O_pad, 1)
    b_o = jnp.pad(bias.astype(f32), (0, O_pad - O))[:, None]          # (O_pad, 1)

    out_fused = pl.pallas_call(
        conv1d_fused_kernel,
        out_shape=jax.ShapeDtypeStruct((L_pad, N_pad * O_pad), f32),
        grid=(nNb, nLb),
        in_specs=[
            pl.BlockSpec((1, bn, blh), lambda i, j: (j, i, 0)),        # halo input tile
            pl.BlockSpec((K, O_pad, 1), lambda i, j: (0, 0, 0)),       # taps (constant)
            pl.BlockSpec((O_pad, 1), lambda i, j: (0, 0)),             # bias (constant)
        ],
        out_specs=pl.BlockSpec((bl, bn * O_pad), lambda i, j: (j, i)),
        compiler_params=pltpu.CompilerParams(
            dimension_semantics=("parallel", "parallel"),
            vmem_limit_bytes=48 * 1024 * 1024,                         # safe under v7x 64 MiB
        ),
    )(xh, w_ko, b_o)

    # (L_pad, N_pad*O_pad) -> (L_pad, N_pad, O_pad): free row-major metadata reshape.
    out = out_fused.reshape(L_pad, N_pad, O_pad)
    if (L_pad, N_pad, O_pad) != (L, N, O):
        out = out[:L, :N, :O]   # only costs a copy when padding was actually needed
    return out


if __name__ == "__main__":
    # Small deterministic example consistent with the module's forward:
    # input (seq_len L, batch N, 1); Conv1DLayer(out_channels=8, kernel_size=3).
    L, N = 512, 16
    out_channels, kernel_size = 8, 3

    key = jax.random.PRNGKey(0)
    kx, kw, kb = jax.random.split(key, 3)

    x = jax.random.normal(kx, (L, N, 1), dtype=jnp.float32)

    # Deterministic torch-style init: U(-sqrt(1/(C_in*K)), +sqrt(1/(C_in*K)))
    fan = 1 * kernel_size
    bound = 1.0 / (fan ** 0.5)
    weight = jax.random.uniform(kw, (out_channels, 1, kernel_size),
                                minval=-bound, maxval=bound, dtype=jnp.float32)
    bias = jax.random.uniform(kb, (out_channels,),
                              minval=-bound, maxval=bound, dtype=jnp.float32)

    out = jax.jit(conv1d_layer)(x, weight, bias)
    out = jax.block_until_ready(out)

    # Independent pure-f32 reference (same math as torch Conv1d w/ reflect padding).
    pad = (kernel_size - 1) // 2
    x2 = x[:, :, 0]                                                    # (L, N)
    xr = jnp.pad(x2, ((pad, pad), (0, 0)), mode="reflect")             # (L+K-1, N)
    w_ko = jnp.transpose(weight[:, 0, :], (1, 0))                      # (K, O)
    ref = bias[None, None, :] + sum(
        xr[k:k + L, :, None] * w_ko[k][None, None, :] for k in range(kernel_size)
    )                                                                  # (L, N, O)

    assert out.shape == (L, N, out_channels), out.shape
    err = float(jnp.max(jnp.abs(out - ref)))
    assert jnp.allclose(out, ref, atol=1e-5, rtol=1e-5), err
    print("KERNEL_OK")
</pallas_src>

<mosaic_0001>
module attributes {stable_mosaic.version = 11 : i64} {
  func.func @conv1d_fused_kernel(%arg0: i32, %arg1: i32, %arg2: memref<1x16x258xf32, #tpu.memory_space<vmem>>, %arg3: memref<3x8x1xf32, #tpu.memory_space<vmem>>, %arg4: memref<8x1xf32, #tpu.memory_space<vmem>>, %arg5: memref<256x128xf32, #tpu.memory_space<vmem>>) attributes {dimension_semantics = [#tpu.dimension_semantics<parallel>, #tpu.dimension_semantics<parallel>], iteration_bounds = array<i64: 1, 2>, scalar_prefetch = 0 : i64, scratch_operands = 0 : i64, tpu.core_type = #tpu.core_type<tc>, window_params = [{transform_indices = @transform_0, window_bounds = array<i64: 1, 16, 258>}, {pipeline_mode = #tpu.pipeline_mode<synchronous>, transform_indices = @transform_1, window_bounds = array<i64: 3, 8, 1>}, {pipeline_mode = #tpu.pipeline_mode<synchronous>, transform_indices = @transform_2, window_bounds = array<i64: 8, 1>}, {transform_indices = @transform_3, window_bounds = array<i64: 256, 128>}]} {
    %c0 = arith.constant 0 : index
    %c0_0 = arith.constant 0 : index
    %c0_1 = arith.constant 0 : index
    %0 = vector.load %arg2[%c0, %c0_0, %c0_1] : memref<1x16x258xf32, #tpu.memory_space<vmem>>, vector<1x16x258xf32>
    %1 = vector.shape_cast %0 : vector<1x16x258xf32> to vector<16x258xf32>
    %2 = vector.extract_strided_slice %1 {offsets = [0, 0], sizes = [16, 256], strides = [1, 1]} : vector<16x258xf32> to vector<16x256xf32>
    %3 = vector.shape_cast %2 : vector<16x256xf32> to vector<16x1x256xf32>
    %c0_2 = arith.constant 0 : index
    %c0_3 = arith.constant 0 : index
    %c0_4 = arith.constant 0 : index
    %4 = vector.load %arg3[%c0_2, %c0_3, %c0_4] : memref<3x8x1xf32, #tpu.memory_space<vmem>>, vector<1x8x1xf32>
    %5 = vector.shape_cast %4 : vector<1x8x1xf32> to vector<8x1xf32>
    %6 = vector.shape_cast %5 : vector<8x1xf32> to vector<1x8x1xf32>
    %7 = vector.broadcast %3 : vector<16x1x256xf32> to vector<16x8x256xf32>
    %8 = vector.broadcast %6 : vector<1x8x1xf32> to vector<16x8x256xf32>
    %9 = arith.mulf %7, %8 : vector<16x8x256xf32>
    %c0_5 = arith.constant 0 : index
    %c0_6 = arith.constant 0 : index
    %10 = vector.load %arg4[%c0_5, %c0_6] : memref<8x1xf32, #tpu.memory_space<vmem>>, vector<8x1xf32>
    %11 = vector.shape_cast %10 : vector<8x1xf32> to vector<1x8x1xf32>
    %12 = vector.broadcast %11 : vector<1x8x1xf32> to vector<16x8x256xf32>
    %13 = arith.addf %9, %12 : vector<16x8x256xf32>
    %14 = vector.extract_strided_slice %1 {offsets = [0, 1], sizes = [16, 256], strides = [1, 1]} : vector<16x258xf32> to vector<16x256xf32>
    %15 = vector.shape_cast %14 : vector<16x256xf32> to vector<16x1x256xf32>
    %c1 = arith.constant 1 : index
    %c0_7 = arith.constant 0 : index
    %c0_8 = arith.constant 0 : index
    %16 = vector.load %arg3[%c1, %c0_7, %c0_8] : memref<3x8x1xf32, #tpu.memory_space<vmem>>, vector<1x8x1xf32>
    %17 = vector.shape_cast %16 : vector<1x8x1xf32> to vector<8x1xf32>
    %18 = vector.shape_cast %17 : vector<8x1xf32> to vector<1x8x1xf32>
    %19 = vector.broadcast %15 : vector<16x1x256xf32> to vector<16x8x256xf32>
    %20 = vector.broadcast %18 : vector<1x8x1xf32> to vector<16x8x256xf32>
    %21 = arith.mulf %19, %20 : vector<16x8x256xf32>
    %22 = arith.addf %13, %21 : vector<16x8x256xf32>
    %23 = vector.extract_strided_slice %1 {offsets = [0, 2], sizes = [16, 256], strides = [1, 1]} : vector<16x258xf32> to vector<16x256xf32>
    %24 = vector.shape_cast %23 : vector<16x256xf32> to vector<16x1x256xf32>
    %c2 = arith.constant 2 : index
    %c0_9 = arith.constant 0 : index
    %c0_10 = arith.constant 0 : index
    %25 = vector.load %arg3[%c2, %c0_9, %c0_10] : memref<3x8x1xf32, #tpu.memory_space<vmem>>, vector<1x8x1xf32>
    %26 = vector.shape_cast %25 : vector<1x8x1xf32> to vector<8x1xf32>
    %27 = vector.shape_cast %26 : vector<8x1xf32> to vector<1x8x1xf32>
    %28 = vector.broadcast %24 : vector<16x1x256xf32> to vector<16x8x256xf32>
    %29 = vector.broadcast %27 : vector<1x8x1xf32> to vector<16x8x256xf32>
    %30 = arith.mulf %28, %29 : vector<16x8x256xf32>
    %31 = arith.addf %22, %30 : vector<16x8x256xf32>
    %32 = vector.shape_cast %31 : vector<16x8x256xf32> to vector<128x256xf32>
    %33 = tpu.transpose %32, [1, 0] : vector<128x256xf32> -> vector<256x128xf32>
    %c0_11 = arith.constant 0 : index
    %c0_12 = arith.constant 0 : index
    %34 = vector.load %arg5[%c0_11, %c0_12] : memref<256x128xf32, #tpu.memory_space<vmem>>, vector<256x128xf32>
    tpu.vector_store %arg5[%c0_11, %c0_12], %33 {strides = array<i32>} : memref<256x128xf32, #tpu.memory_space<vmem>>, vector<256x128xf32>,
    return
  }
  func.func @transform_0(%arg0: i32, %arg1: i32) -> (i32, i32, i32) {
    %c0_i32 = arith.constant 0 : i32
    %c0_i32_0 = arith.constant 0 : i32
    return %arg1, %arg0, %c0_i32 : i32, i32, i32
  }
  func.func @transform_1(%arg0: i32, %arg1: i32) -> (i32, i32, i32) {
    %c0_i32 = arith.constant 0 : i32
    %c0_i32_0 = arith.constant 0 : i32
    %c0_i32_1 = arith.constant 0 : i32
    %c0_i32_2 = arith.constant 0 : i32
    return %c0_i32, %c0_i32_0, %c0_i32_1 : i32, i32, i32
  }
  func.func @transform_2(%arg0: i32, %arg1: i32) -> (i32, i32) {
    %c0_i32 = arith.constant 0 : i32
    %c0_i32_0 = arith.constant 0 : i32
    %c0_i32_1 = arith.constant 0 : i32
    return %c0_i32, %c0_i32_0 : i32, i32
  }
  func.func @transform_3(%arg0: i32, %arg1: i32) -> (i32, i32) {
    %c0_i32 = arith.constant 0 : i32
    return %arg1, %arg0 : i32, i32
  }
}

</mosaic_0001>

<llo_original>
// kernel: conv1d_layer.1
$region0: #{conv1d_layer.1}
  #allocation0 [shape = 'u32[]', space=smem, size = 0x4, offset = 0x4, fixed_abs, tag = 'smem constant byte address 0x4 - core index']
  #allocation1 [shape = 'u32[144,128]{1,0:T(1,128)}', space=vmem, size = 0x12000, scoped, tag = 'internal scratch']
  %s0 = inlined_call_operand.vmem [shape: f32[2,16,258], index: 0, kind: input, shape index: {}]
  %s1 = inlined_call_operand.vmem [shape: f32[3,8,1], index: 1, kind: input, shape index: {}]
  %s2 = inlined_call_operand.vmem [shape: f32[8,1], index: 2, kind: input, shape index: {}]
  %s3 = inlined_call_operand.vmem [shape: f32[512,128], index: 3, kind: output, shape index: {}]
  %s4 = sld [smem:[#allocation0]]
  $region45: #{conv1d_layer.1} parent=0
    _
  %s6 = ssub.s32 1, %s4
  %s7 = scalar_select 0, %s6, %s4
  loop: start=0, step=1, limit=4
  $region2: #{conv1d_layer.1} parent=0 // loop_pre_header
    _
  $region3: #{conv1d_layer.1} parent=0 // loop_header
    %s9 = sphi 0, %s13
    %p10 = scmp.ge.s32.totalorder %s9, 4
    %s16 = sphi 0, %s28
    %s17 = sphi 0, %s24
    %s18 = sphi 0, %s16
    %s19 = sphi 0, %s17
    %s20 = sphi 0, %s18
    %s21 = sphi 0, %s19
    %s33 = sphi 0, %s35
    %s36 = sphi 0, %s33
    %s37 = sphi 0, %s36
    %s53 = sphi 0, %s37
    %s57 = sphi 0, %s57
    %s59 = sphi 0, %s57
    %s60 = sphi 0, %s59
    %s74 = sphi 0, %s60
    %s78 = sphi 0, %s78
    %s80 = sphi 0, %s78
    %s81 = sphi 0, %s80
    %s95 = sphi 0, %s81
    %s103 = sphi 0, %s105
    %s106 = sphi 0, %s103
    %s107 = sphi 0, %s106
    %s123 = sphi 0, %s107
  $region4: #{conv1d_layer.1} parent=0 // loop_header_branch
    %12 = sbr.rel (%p10) target = $region8
  $region5: #{conv1d_layer.1} parent=0 // loop_body
    %s14 = ssub.s32 %s9, 1
    %s15 = ssub.s32 %s9, 2
    %s22 = sadd.s32 1, %s17
    %p23 = scmp.ge.s32.totalorder %s22, 2
    %s24 = scalar_select %p23, 0, %s22
    %s25 = sadd.s32 1, %s16
    %s26 = scalar_select %p23, %s25, %s16
    %p27 = scmp.ge.s32.totalorder %s26, 1
    %s28 = scalar_select %p27, 0, %s26
    %s29 = ssub.s32 %s17, %s24
    %s30 = ssub.s32 %s16, %s28
    %s31 = sor.u32 %s29, %s30
    %p32 = scmp.eq.s32.totalorder %s31, 0
    %s34 = sadd.s32 %s33, 1
    %s35 = scalar_select %p32, %s33, %s34
    %p38 = pneg %p32
    %p39 = scmp.eq.s32.totalorder %s9, 1
    %p40 = por %p38, %p39
    %p41 = scmp.ne.s32.totalorder %s33, %s36
    %p42 = scmp.eq.s32.totalorder %s9, 0
    %p43 = por %p41, %p42
    %p44 = scmp.ne.s32.totalorder %s33, %s36
    %p45 = scmp.eq.s32.totalorder %s14, 1
    %p46 = por %p44, %p45
    %p47 = scmp.ne.s32.totalorder %s36, %s37
    %p48 = scmp.eq.s32.totalorder %s14, 0
    %p49 = por %p47, %p48
    %p50 = scmp.ne.s32.totalorder %s36, %s37
    %p51 = scmp.eq.s32.totalorder %s15, 1
    %p52 = por %p50, %p51
    %p54 = scmp.ne.s32.totalorder %s37, %s53
    %p55 = scmp.eq.s32.totalorder %s15, 0
    %p56 = por %p54, %p55
    %s58 = sadd.s32 %s57, 1
    %p61 = scmp.eq.s32.totalorder %s9, 1
    %p62 = scmp.ne.s32.totalorder %s57, %s59
    %p63 = scmp.eq.s32.totalorder %s9, 0
    %p64 = por %p62, %p63
    %p65 = scmp.ne.s32.totalorder %s57, %s59
    %p66 = scmp.eq.s32.totalorder %s14, 1
    %p67 = por %p65, %p66
    %p68 = scmp.ne.s32.totalorder %s59, %s60
    %p69 = scmp.eq.s32.totalorder %s14, 0
    %p70 = por %p68, %p69
    %p71 = scmp.ne.s32.totalorder %s59, %s60
    %p72 = scmp.eq.s32.totalorder %s15, 1
    %p73 = por %p71, %p72
    %p75 = scmp.ne.s32.totalorder %s60, %s74
    %p76 = scmp.eq.s32.totalorder %s15, 0
    %p77 = por %p75, %p76
    %s79 = sadd.s32 %s78, 1
    %p82 = scmp.eq.s32.totalorder %s9, 1
    %p83 = scmp.ne.s32.totalorder %s78, %s80
    %p84 = scmp.eq.s32.totalorder %s9, 0
    %p85 = por %p83, %p84
    %p86 = scmp.ne.s32.totalorder %s78, %s80
    %p87 = scmp.eq.s32.totalorder %s14, 1
    %p88 = por %p86, %p87
    %p89 = scmp.ne.s32.totalorder %s80, %s81
    %p90 = scmp.eq.s32.totalorder %s14, 0
    %p91 = por %p89, %p90
    %p92 = scmp.ne.s32.totalorder %s80, %s81
    %p93 = scmp.eq.s32.totalorder %s15, 1
    %p94 = por %p92, %p93
    %p96 = scmp.ne.s32.totalorder %s81, %s95
    %p97 = scmp.eq.s32.totalorder %s15, 0
    %p98 = por %p96, %p97
    %s99 = ssub.s32 %s17, %s24
    %s100 = ssub.s32 %s16, %s28
    %s101 = sor.u32 %s99, %s100
    %p102 = scmp.eq.s32.totalorder %s101, 0
    %s104 = sadd.s32 %s103, 1
    %s105 = scalar_select %p102, %s103, %s104
    %p108 = pneg %p102
    %p109 = scmp.eq.s32.totalorder %s9, 1
    %p110 = por %p108, %p109
    %p111 = scmp.ne.s32.totalorder %s103, %s106
    %p112 = scmp.eq.s32.totalorder %s9, 0
    %p113 = por %p111, %p112
    %p114 = scmp.ne.s32.totalorder %s103, %s106
    %p115 = scmp.eq.s32.totalorder %s14, 1
    %p116 = por %p114, %p115
    %p117 = scmp.ne.s32.totalorder %s106, %s107
    %p118 = scmp.eq.s32.totalorder %s14, 0
    %p119 = por %p117, %p118
    %p120 = scmp.ne.s32.totalorder %s106, %s107
    %p121 = scmp.eq.s32.totalorder %s15, 1
    %p122 = por %p120, %p121
    %p124 = scmp.ne.s32.totalorder %s107, %s123
    %p125 = scmp.eq.s32.totalorder %s15, 0
    %p126 = por %p124, %p125
    %p127 = scmp.le.s32.totalorder 1, %s9
    %p128 = scmp.lt.s32.totalorder %s9, 3
    %p129 = pnand %p127, %p128
    %p130 = pneg %p129
    // Predicated region
    $region9: #{conv1d_layer.1} parent=5 // pred_check
      _
    $region10: #{conv1d_layer.1} parent=5 // pred_check_branch
      %132 = sbr.rel (%p129) target = $region12
    $region11: #{conv1d_layer.1} parent=5 // pred_region
      %s133 = ssub.s32 %s9, 1
      // Predicated region
      $region13: #{conv1d_layer.1} parent=11 // pred_check
        %p134 = pneg %p70
      $region14: #{conv1d_layer.1} parent=11 // pred_check_branch
        %136 = sbr.rel (%p134) target = $region16
      $region15: #{conv1d_layer.1} parent=11 // pred_region
        _
      $region16: #{conv1d_layer.1} parent=11 // pred_fallthru
        _
      // Predicated region
      $region17: #{conv1d_layer.1} parent=11 // pred_check
        %p137 = pneg %p91
      $region18: #{conv1d_layer.1} parent=11 // pred_check_branch
        %139 = sbr.rel (%p137) target = $region20
      $region19: #{conv1d_layer.1} parent=11 // pred_region
        _
      $region20: #{conv1d_layer.1} parent=11 // pred_fallthru
        _
    $region12: #{conv1d_layer.1} parent=5 // pred_fallthru
      _
    %p140 = scmp.lt.s32.totalorder %s9, 2
    // Predicated region
    $region21: #{conv1d_layer.1} parent=5 // pred_check
      %p141 = pneg %p140
    $region22: #{conv1d_layer.1} parent=5 // pred_check_branch
      %143 = sbr.rel (%p141) target = $region24
    $region23: #{conv1d_layer.1} parent=5 // pred_region
      // Predicated region
      $region25: #{conv1d_layer.1} parent=23 // pred_check
        %p144 = pneg %p43
      $region26: #{conv1d_layer.1} parent=23 // pred_check_branch
        %146 = sbr.rel (%p144) target = $region28
      $region27: #{conv1d_layer.1} parent=23 // pred_region
        %s147 = smul.u32 2, %s16
        %p148 = scmp.lt.s32.totalorder %s17, 1
        %s149 = scalar_select %p148, %s17, 1
        %p150 = scmp.lt.s32.totalorder %s147, 1
        %s151 = scalar_select %p150, %s147, 1
        %s152 = smul.addr %s151, 3
        %s153 = smul.addr %s149, 6
        %s154 = sadd.s32 %s152, %s153
        %s155 = smul.addr %s154, 8
        %s156 = scalar_lea.vmem %s0, %s155
        %s157 = smul.u32 2, %s16
      $region28: #{conv1d_layer.1} parent=23 // pred_fallthru
        _
    $region24: #{conv1d_layer.1} parent=5 // pred_fallthru
      _
    %p158 = scmp.le.s32.totalorder 1, %s9
    %p159 = scmp.lt.s32.totalorder %s9, 3
    %p160 = pnand %p158, %p159
    %p161 = pneg %p160
    // Predicated region
    $region29: #{conv1d_layer.1} parent=5 // pred_check
      _
    $region30: #{conv1d_layer.1} parent=5 // pred_check_branch
      %163 = sbr.rel (%p160) target = $region32
    $region31: #{conv1d_layer.1} parent=5 // pred_region
      %s164 = ssub.s32 %s9, 1
      %s165 = smul.u32 2, %s18
      %p166 = scmp.lt.s32.totalorder %s19, 1
      %s167 = scalar_select %p166, %s19, 1
      %p168 = scmp.lt.s32.totalorder %s165, 1
      %s169 = scalar_select %p168, %s165, 1
      %s170 = smul.addr %s169, 3
      %s171 = smul.addr %s167, 6
      %s172 = sadd.s32 %s170, %s171
      %s173 = smul.addr %s172, 8
      %s174 = scalar_lea.vmem %s0, %s173
      %p175 = pneg %p49
      %p176 = pneg %p46
      %p177 = pneg %p70
      %p178 = pneg %p67
      %p179 = pneg %p91
      %p180 = pneg %p88
      %p181 = pneg %p119
      %p182 = pneg %p116
      %s183 = smul.u32 32, %s19
      %p184 = scmp.lt.s32.totalorder %s183, 63
      %s185 = scalar_select %p184, %s183, 63
      %p186 = scmp.lt.s32.totalorder %s18, 0
      %s187 = scalar_select %p186, %s18, 0
      %s188 = sadd.s32 %s187, %s185
      %s189 = smul.addr %s188, 8
      %s190 = scalar_lea.vmem %s3, %s189
      %s191 = smul.u32 2, %s18
      %p192 = scmp.lt.s32.totalorder %s19, 1
      %s193 = scalar_select %p192, %s19, 1
      %p194 = scmp.lt.s32.totalorder %s191, 1
      %s195 = scalar_select %p194, %s191, 1
      %s196 = smul.addr %s195, 3
      %s197 = smul.addr %s193, 6
      %s198 = sadd.s32 %s196, %s197
      %s199 = smul.addr %s198, 8
      %s200 = scalar_lea.vmem %s0, %s199
      %s201 = smul.u32 2, %s18
      %s202 = smul.u32 32, %s19
      %p203 = scmp.lt.s32.totalorder %s202, 63
      %s204 = scalar_select %p203, %s202, 63
      %p205 = scmp.lt.s32.totalorder %s18, 0
      %s206 = scalar_select %p205, %s18, 0
      %s207 = sadd.s32 %s206, %s204
      %s208 = smul.addr %s207, 8
      %s209 = scalar_lea.vmem %s3, %s208
      %s210 = smul.u32 32, %s19
      %v211 = vld [vmem:[%s200] sm:$0xff]
      %v212 = vld [vmem:[%s200 + $0x8] sm:$0xff]
      %v213 = vld [vmem:[%s200 + $0x10] sm:$0xff]
      %v214 = vld [vmem:[%s200 + $0x18] sm:$0xff]
      %v215 = vld [vmem:[%s200 + $0x20] sm:$0xff]
      %v216 = vld [vmem:[%s200 + $0x28] sm:$0xff]
      %v221 = vcombine.low %v211, %v212
      %v222 = vcombine.high %v211, %v212
      %v224 = vunpack.c.l.s4 1966171168
      %v225 = vunpack.c.0.s8 %v224
      %v226 = vlaneseq
      %v227 = vshrl.u32 %v226, 7
      %v228 = vsub.s32 %v225, %v227
      %v229 = vrot.slane %v221, %v228
      %v231 = vunpack.c.l.s4 1966171168
      %v232 = vunpack.c.0.s8 %v231
      %v233 = vlaneseq
      %v234 = vshrl.u32 %v233, 7
      %v235 = vsub.s32 %v232, %v234
      %v236 = vrot.slane %v222, %v235
      %v237 = vcombine.high %v229, %v229
      %v238 = vcombine.high %v236, %v236
      %v240 = vunpack.c.l.s4 1966171168
      %v241 = vunpack.c.0.s8 %v240
      %v242 = vlaneseq
      %v243 = vshrl.u32 %v242, 7
      %v244 = vsub.s32 %v241, %v243
      %v245 = vrot.slane %v229, %v244
      %v247 = vunpack.c.l.s4 1966171168
      %v248 = vunpack.c.0.s8 %v247
      %v249 = vlaneseq
      %v250 = vshrl.u32 %v249, 7
      %v251 = vsub.s32 %v248, %v250
      %v252 = vrot.slane %v236, %v251
      %v254 = vunpack.c.l.s4 1966171168
      %v255 = vunpack.c.0.s8 %v254
      %v256 = vlaneseq
      %v257 = vshrl.u32 %v256, 7
      %v258 = vsub.s32 %v255, %v257
      %v259 = vrot.slane %v237, %v258
      %v261 = vunpack.c.l.s4 1966171168
      %v262 = vunpack.c.0.s8 %v261
      %v263 = vlaneseq
      %v264 = vshrl.u32 %v263, 7
      %v265 = vsub.s32 %v262, %v264
      %v266 = vrot.slane %v238, %v265
      %v267 = vcombine.high %v245, %v245
      %v268 = vcombine.high %v252, %v252
      %v269 = vcombine.high %v259, %v259
      %v270 = vcombine.high %v266, %v266
      %v271 = vcombine.low %v214, %v215
      %v272 = vcombine.high %v214, %v215
      %v274 = vunpack.c.l.s4 1966171168
      %v275 = vunpack.c.0.s8 %v274
      %v276 = vlaneseq
      %v277 = vshrl.u32 %v276, 7
      %v278 = vsub.s32 %v275, %v277
      %v279 = vrot.slane %v271, %v278
      %v281 = vunpack.c.l.s4 1966171168
      %v282 = vunpack.c.0.s8 %v281
      %v283 = vlaneseq
      %v284 = vshrl.u32 %v283, 7
      %v285 = vsub.s32 %v282, %v284
      %v286 = vrot.slane %v272, %v285
      %v287 = vcombine.high %v279, %v279
      %v288 = vcombine.high %v286, %v286
      %v290 = vunpack.c.l.s4 1966171168
      %v291 = vunpack.c.0.s8 %v290
      %v292 = vlaneseq
      %v293 = vshrl.u32 %v292, 7
      %v294 = vsub.s32 %v291, %v293
      %v295 = vrot.slane %v279, %v294
      %v297 = vunpack.c.l.s4 1966171168
      %v298 = vunpack.c.0.s8 %v297
      %v299 = vlaneseq
      %v300 = vshrl.u32 %v299, 7
      %v301 = vsub.s32 %v298, %v300
      %v302 = vrot.slane %v286, %v301
      %v304 = vunpack.c.l.s4 1966171168
      %v305 = vunpack.c.0.s8 %v304
      %v306 = vlaneseq
      %v307 = vshrl.u32 %v306, 7
      %v308 = vsub.s32 %v305, %v307
      %v309 = vrot.slane %v287, %v308
      %v311 = vunpack.c.l.s4 1966171168
      %v312 = vunpack.c.0.s8 %v311
      %v313 = vlaneseq
      %v314 = vshrl.u32 %v313, 7
      %v315 = vsub.s32 %v312, %v314
      %v316 = vrot.slane %v288, %v315
      %v317 = vcombine.high %v295, %v295
      %v318 = vcombine.high %v302, %v302
      %v319 = vcombine.high %v309, %v309
      %v320 = vcombine.high %v316, %v316
      %v321 = vld [vmem:[%s1] sm:$0xff]
      %v322 = vlaneseq
      %v323 = vshrl.u32 %v322, 7
      %v324 = vsub.s32 0, %v323
      %v325 = vrot.slane %v245, %v324
      %v326 = vlaneseq
      %v327 = vshrl.u32 %v326, 7
      %v328 = vsub.s32 1, %v327
      %v329 = vrot.slane %v245, %v328
      %v330 = vlaneseq
      %v331 = vshrl.u32 %v330, 7
      %v332 = vsub.s32 0, %v331
      %v333 = vrot.slane %v259, %v332
      %v334 = vlaneseq
      %v335 = vshrl.u32 %v334, 7
      %v336 = vsub.s32 1, %v335
      %v337 = vrot.slane %v259, %v336
      %v338 = vlaneseq
      %v339 = vshrl.u32 %v338, 7
      %v340 = vsub.s32 0, %v339
      %v341 = vrot.slane %v267, %v340
      %v342 = vlaneseq
      %v343 = vshrl.u32 %v342, 7
      %v344 = vsub.s32 1, %v343
      %v345 = vrot.slane %v267, %v344
      %v346 = vlaneseq
      %v347 = vshrl.u32 %v346, 7
      %v348 = vsub.s32 0, %v347
      %v349 = vrot.slane %v269, %v348
      %v350 = vlaneseq
      %v351 = vshrl.u32 %v350, 7
      %v352 = vsub.s32 1, %v351
      %v353 = vrot.slane %v269, %v352
      %v354 = vlaneseq
      %v355 = vshrl.u32 %v354, 7
      %v356 = vsub.s32 0, %v355
      %v357 = vrot.slane %v252, %v356
      %v358 = vlaneseq
      %v359 = vshrl.u32 %v358, 7
      %v360 = vsub.s32 1, %v359
      %v361 = vrot.slane %v252, %v360
      %v362 = vlaneseq
      %v363 = vshrl.u32 %v362, 7
      %v364 = vsub.s32 0, %v363
      %v365 = vrot.slane %v266, %v364
      %v366 = vlaneseq
      %v367 = vshrl.u32 %v366, 7
      %v368 = vsub.s32 1, %v367
      %v369 = vrot.slane %v266, %v368
      %v370 = vlaneseq
      %v371 = vshrl.u32 %v370, 7
      %v372 = vsub.s32 0, %v371
      %v373 = vrot.slane %v268, %v372
      %v374 = vlaneseq
      %v375 = vshrl.u32 %v374, 7
      %v376 = vsub.s32 1, %v375
      %v377 = vrot.slane %v268, %v376
      %v378 = vlaneseq
      %v379 = vshrl.u32 %v378, 7
      %v380 = vsub.s32 0, %v379
      %v381 = vrot.slane %v270, %v380
      %v382 = vlaneseq
      %v383 = vshrl.u32 %v382, 7
      %v384 = vsub.s32 1, %v383
      %v385 = vrot.slane %v270, %v384
      %v386 = vlaneseq
      %v387 = vshrl.u32 %v386, 7
      %v388 = vsub.s32 0, %v387
      %v389 = vrot.slane %v295, %v388
      %v390 = vlaneseq
      %v391 = vshrl.u32 %v390, 7
      %v392 = vsub.s32 1, %v391
      %v393 = vrot.slane %v295, %v392
      %v394 = vlaneseq
      %v395 = vshrl.u32 %v394, 7
      %v396 = vsub.s32 0, %v395
      %v397 = vrot.slane %v309, %v396
      %v398 = vlaneseq
      %v399 = vshrl.u32 %v398, 7
      %v400 = vsub.s32 1, %v399
      %v401 = vrot.slane %v309, %v400
      %v402 = vlaneseq
      %v403 = vshrl.u32 %v402, 7
      %v404 = vsub.s32 0, %v403
      %v405 = vrot.slane %v317, %v404
      %v406 = vlaneseq
      %v407 = vshrl.u32 %v406, 7
      %v408 = vsub.s32 1, %v407
      %v409 = vrot.slane %v317, %v408
      %v410 = vlaneseq
      %v411 = vshrl.u32 %v410, 7
      %v412 = vsub.s32 0, %v411
      %v413 = vrot.slane %v319, %v412
      %v414 = vlaneseq
      %v415 = vshrl.u32 %v414, 7
      %v416 = vsub.s32 1, %v415
      %v417 = vrot.slane %v319, %v416
      %v418 = vlaneseq
      %v419 = vshrl.u32 %v418, 7
      %v420 = vsub.s32 0, %v419
      %v421 = vrot.slane %v302, %v420
      %v422 = vlaneseq
      %v423 = vshrl.u32 %v422, 7
      %v424 = vsub.s32 1, %v423
      %v425 = vrot.slane %v302, %v424
      %v426 = vlaneseq
      %v427 = vshrl.u32 %v426, 7
      %v428 = vsub.s32 0, %v427
      %v429 = vrot.slane %v316, %v428
      %v430 = vlaneseq
      %v431 = vshrl.u32 %v430, 7
      %v432 = vsub.s32 1, %v431
      %v433 = vrot.slane %v316, %v432
      %v434 = vlaneseq
      %v435 = vshrl.u32 %v434, 7
      %v436 = vsub.s32 0, %v435
      %v437 = vrot.slane %v318, %v436
      %v438 = vlaneseq
      %v439 = vshrl.u32 %v438, 7
      %v440 = vsub.s32 1, %v439
      %v441 = vrot.slane %v318, %v440
      %v442 = vlaneseq
      %v443 = vshrl.u32 %v442, 7
      %v444 = vsub.s32 0, %v443
      %v445 = vrot.slane %v320, %v444
      %v446 = vlaneseq
      %v447 = vshrl.u32 %v446, 7
      %v448 = vsub.s32 1, %v447
      %v449 = vrot.slane %v320, %v448
      %483 = vset.pattern.permute.xlu0 0
      %484 = vperm.xlu0 %483, %v321
      %v485 = vpop.permute.xlu0 %484
      %v487 = vmul.f32 %v325, %v485
      %v488 = vmul.f32 %v329, %v485
      %v489 = vmul.f32 %v333, %v485
      %v490 = vmul.f32 %v337, %v485
      %v491 = vmul.f32 %v341, %v485
      %v492 = vmul.f32 %v345, %v485
      %v493 = vmul.f32 %v349, %v485
      %v494 = vmul.f32 %v353, %v485
      %v495 = vmul.f32 %v357, %v485
      %v496 = vmul.f32 %v361, %v485
      %v497 = vmul.f32 %v365, %v485
      %v498 = vmul.f32 %v369, %v485
      %v499 = vmul.f32 %v373, %v485
      %v500 = vmul.f32 %v377, %v485
      %v501 = vmul.f32 %v381, %v485
      %v502 = vmul.f32 %v385, %v485
      %v503 = vmul.f32 %v389, %v485
      %v504 = vmul.f32 %v393, %v485
      %v505 = vmul.f32 %v397, %v485
      %v506 = vmul.f32 %v401, %v485
      %v507 = vmul.f32 %v405, %v485
      %v508 = vmul.f32 %v409, %v485
      %v509 = vmul.f32 %v413, %v485
      %v510 = vmul.f32 %v417, %v485
      %v511 = vmul.f32 %v421, %v485
      %v512 = vmul.f32 %v425, %v485
      %v513 = vmul.f32 %v429, %v485
      %v514 = vmul.f32 %v433, %v485
      %v515 = vmul.f32 %v437, %v485
      %v516 = vmul.f32 %v441, %v485
      %v517 = vmul.f32 %v445, %v485
      %v518 = vmul.f32 %v449, %v485
      %v519 = vld [vmem:[%s2] sm:$0xff]
      %521 = vset.pattern.permute.xlu0 0
      %522 = vperm.xlu0 %521, %v519
      %v523 = vpop.permute.xlu0 %522
      %v525 = vadd.f32 %v487, %v523
      %v526 = vadd.f32 %v488, %v523
      %v527 = vadd.f32 %v489, %v523
      %v528 = vadd.f32 %v490, %v523
      %v529 = vadd.f32 %v491, %v523
      %v530 = vadd.f32 %v492, %v523
      %v531 = vadd.f32 %v493, %v523
      %v532 = vadd.f32 %v494, %v523
      %v533 = vadd.f32 %v495, %v523
      %v534 = vadd.f32 %v496, %v523
      %v535 = vadd.f32 %v497, %v523
      %v536 = vadd.f32 %v498, %v523
      %v537 = vadd.f32 %v499, %v523
      %v538 = vadd.f32 %v500, %v523
      %v539 = vadd.f32 %v501, %v523
      %v540 = vadd.f32 %v502, %v523
      %v541 = vadd.f32 %v503, %v523
      %v542 = vadd.f32 %v504, %v523
      %v543 = vadd.f32 %v505, %v523
      %v544 = vadd.f32 %v506, %v523
      %v545 = vadd.f32 %v507, %v523
      %v546 = vadd.f32 %v508, %v523
      %v547 = vadd.f32 %v509, %v523
      %v548 = vadd.f32 %v510, %v523
      %v549 = vadd.f32 %v511, %v523
      %v550 = vadd.f32 %v512, %v523
      %v551 = vadd.f32 %v513, %v523
      %v552 = vadd.f32 %v514, %v523
      %v553 = vadd.f32 %v515, %v523
      %v554 = vadd.f32 %v516, %v523
      %v555 = vadd.f32 %v517, %v523
      %v556 = vadd.f32 %v518, %v523
      %v559 = vcombine.high %v213, %v213
      %v561 = vunpack.c.l.s4 1966171168
      %v562 = vunpack.c.0.s8 %v561
      %v563 = vlaneseq
      %v564 = vshrl.u32 %v563, 7
      %v565 = vsub.s32 %v562, %v564
      %v566 = vrot.slane %v213, %v565
      %v568 = vunpack.c.l.s4 1966171168
      %v569 = vunpack.c.0.s8 %v568
      %v570 = vlaneseq
      %v571 = vshrl.u32 %v570, 7
      %v572 = vsub.s32 %v569, %v571
      %v573 = vrot.slane %v559, %v572
      %v574 = vcombine.low %v229, %v566
      %v575 = vcombine.high %v229, %v566
      %v576 = vcombine.low %v236, %v573
      %v577 = vcombine.high %v236, %v573
      %v579 = vunpack.c.l.s4 1966171168
      %v580 = vunpack.c.0.s8 %v579
      %v581 = vlaneseq
      %v582 = vshrl.u32 %v581, 7
      %v583 = vsub.s32 %v580, %v582
      %v584 = vrot.slane %v574, %v583
      %v586 = vunpack.c.l.s4 1966171168
      %v587 = vunpack.c.0.s8 %v586
      %v588 = vlaneseq
      %v589 = vshrl.u32 %v588, 7
      %v590 = vsub.s32 %v587, %v589
      %v591 = vrot.slane %v576, %v590
      %v593 = vunpack.c.l.s4 1966171168
      %v594 = vunpack.c.0.s8 %v593
      %v595 = vlaneseq
      %v596 = vshrl.u32 %v595, 7
      %v597 = vsub.s32 %v594, %v596
      %v598 = vrot.slane %v575, %v597
      %v600 = vunpack.c.l.s4 1966171168
      %v601 = vunpack.c.0.s8 %v600
      %v602 = vlaneseq
      %v603 = vshrl.u32 %v602, 7
      %v604 = vsub.s32 %v601, %v603
      %v605 = vrot.slane %v577, %v604
      %v606 = vcombine.high %v584, %v584
      %v607 = vcombine.high %v591, %v591
      %v608 = vcombine.high %v598, %v598
      %v609 = vcombine.high %v605, %v605
      %v610 = vcombine.high %v216, %v216
      %v612 = vunpack.c.l.s4 1966171168
      %v613 = vunpack.c.0.s8 %v612
      %v614 = vlaneseq
      %v615 = vshrl.u32 %v614, 7
      %v616 = vsub.s32 %v613, %v615
      %v617 = vrot.slane %v216, %v616
      %v619 = vunpack.c.l.s4 1966171168
      %v620 = vunpack.c.0.s8 %v619
      %v621 = vlaneseq
      %v622 = vshrl.u32 %v621, 7
      %v623 = vsub.s32 %v620, %v622
      %v624 = vrot.slane %v610, %v623
      %v625 = vcombine.low %v279, %v617
      %v626 = vcombine.high %v279, %v617
      %v627 = vcombine.low %v286, %v624
      %v628 = vcombine.high %v286, %v624
      %v630 = vunpack.c.l.s4 1966171168
      %v631 = vunpack.c.0.s8 %v630
      %v632 = vlaneseq
      %v633 = vshrl.u32 %v632, 7
      %v634 = vsub.s32 %v631, %v633
      %v635 = vrot.slane %v625, %v634
      %v637 = vunpack.c.l.s4 1966171168
      %v638 = vunpack.c.0.s8 %v637
      %v639 = vlaneseq
      %v640 = vshrl.u32 %v639, 7
      %v641 = vsub.s32 %v638, %v640
      %v642 = vrot.slane %v627, %v641
      %v644 = vunpack.c.l.s4 1966171168
      %v645 = vunpack.c.0.s8 %v644
      %v646 = vlaneseq
      %v647 = vshrl.u32 %v646, 7
      %v648 = vsub.s32 %v645, %v647
      %v649 = vrot.slane %v626, %v648
      %v651 = vunpack.c.l.s4 1966171168
      %v652 = vunpack.c.0.s8 %v651
      %v653 = vlaneseq
      %v654 = vshrl.u32 %v653, 7
      %v655 = vsub.s32 %v652, %v654
      %v656 = vrot.slane %v628, %v655
      %v657 = vcombine.high %v635, %v635
      %v658 = vcombine.high %v642, %v642
      %v659 = vcombine.high %v649, %v649
      %v660 = vcombine.high %v656, %v656
      %s661 = scalar_lea.vmem %s1, 8
      %v662 = vld [vmem:[%s661] sm:$0xff]
      %v663 = vlaneseq
      %v664 = vshrl.u32 %v663, 7
      %v665 = vsub.s32 0, %v664
      %v666 = vrot.slane %v584, %v665
      %v667 = vlaneseq
      %v668 = vshrl.u32 %v667, 7
      %v669 = vsub.s32 1, %v668
      %v670 = vrot.slane %v584, %v669
      %v671 = vlaneseq
      %v672 = vshrl.u32 %v671, 7
      %v673 = vsub.s32 2, %v672
      %v674 = vrot.slane %v584, %v673
      %v675 = vlaneseq
      %v676 = vshrl.u32 %v675, 7
      %v677 = vsub.s32 0, %v676
      %v678 = vrot.slane %v598, %v677
      %v679 = vlaneseq
      %v680 = vshrl.u32 %v679, 7
      %v681 = vsub.s32 1, %v680
      %v682 = vrot.slane %v598, %v681
      %v683 = vlaneseq
      %v684 = vshrl.u32 %v683, 7
      %v685 = vsub.s32 2, %v684
      %v686 = vrot.slane %v598, %v685
      %v687 = vlaneseq
      %v688 = vshrl.u32 %v687, 7
      %v689 = vsub.s32 0, %v688
      %v690 = vrot.slane %v606, %v689
      %v691 = vlaneseq
      %v692 = vshrl.u32 %v691, 7
      %v693 = vsub.s32 1, %v692
      %v694 = vrot.slane %v606, %v693
      %v695 = vlaneseq
      %v696 = vshrl.u32 %v695, 7
      %v697 = vsub.s32 2, %v696
      %v698 = vrot.slane %v606, %v697
      %v699 = vlaneseq
      %v700 = vshrl.u32 %v699, 7
      %v701 = vsub.s32 0, %v700
      %v702 = vrot.slane %v608, %v701
      %v703 = vlaneseq
      %v704 = vshrl.u32 %v703, 7
      %v705 = vsub.s32 1, %v704
      %v706 = vrot.slane %v608, %v705
      %v707 = vlaneseq
      %v708 = vshrl.u32 %v707, 7
      %v709 = vsub.s32 2, %v708
      %v710 = vrot.slane %v608, %v709
      %v711 = vlaneseq
      %v712 = vshrl.u32 %v711, 7
      %v713 = vsub.s32 0, %v712
      %v714 = vrot.slane %v591, %v713
      %v715 = vlaneseq
      %v716 = vshrl.u32 %v715, 7
      %v717 = vsub.s32 1, %v716
      %v718 = vrot.slane %v591, %v717
      %v719 = vlaneseq
      %v720 = vshrl.u32 %v719, 7
      %v721 = vsub.s32 2, %v720
      %v722 = vrot.slane %v591, %v721
      %v723 = vlaneseq
      %v724 = vshrl.u32 %v723, 7
      %v725 = vsub.s32 0, %v724
      %v726 = vrot.slane %v605, %v725
      %v727 = vlaneseq
      %v728 = vshrl.u32 %v727, 7
      %v729 = vsub.s32 1, %v728
      %v730 = vrot.slane %v605, %v729
      %v731 = vlaneseq
      %v732 = vshrl.u32 %v731, 7
      %v733 = vsub.s32 2, %v732
      %v734 = vrot.slane %v605, %v733
      %v735 = vlaneseq
      %v736 = vshrl.u32 %v735, 7
      %v737 = vsub.s32 0, %v736
      %v738 = vrot.slane %v607, %v737
      %v739 = vlaneseq
      %v740 = vshrl.u32 %v739, 7
      %v741 = vsub.s32 1, %v740
      %v742 = vrot.slane %v607, %v741
      %v743 = vlaneseq
      %v744 = vshrl.u32 %v743, 7
      %v745 = vsub.s32 2, %v744
      %v746 = vrot.slane %v607, %v745
      %v747 = vlaneseq
      %v748 = vshrl.u32 %v747, 7
      %v749 = vsub.s32 0, %v748
      %v750 = vrot.slane %v609, %v749
      %v751 = vlaneseq
      %v752 = vshrl.u32 %v751, 7
      %v753 = vsub.s32 1, %v752
      %v754 = vrot.slane %v609, %v753
      %v755 = vlaneseq
      %v756 = vshrl.u32 %v755, 7
      %v757 = vsub.s32 2, %v756
      %v758 = vrot.slane %v609, %v757
      %v759 = vlaneseq
      %v760 = vshrl.u32 %v759, 7
      %v761 = vsub.s32 0, %v760
      %v762 = vrot.slane %v635, %v761
      %v763 = vlaneseq
      %v764 = vshrl.u32 %v763, 7
      %v765 = vsub.s32 1, %v764
      %v766 = vrot.slane %v635, %v765
      %v767 = vlaneseq
      %v768 = vshrl.u32 %v767, 7
      %v769 = vsub.s32 2, %v768
      %v770 = vrot.slane %v635, %v769
      %v771 = vlaneseq
      %v772 = vshrl.u32 %v771, 7
      %v773 = vsub.s32 0, %v772
      %v774 = vrot.slane %v649, %v773
      %v775 = vlaneseq
      %v776 = vshrl.u32 %v775, 7
      %v777 = vsub.s32 1, %v776
      %v778 = vrot.slane %v649, %v777
      %v779 = vlaneseq
      %v780 = vshrl.u32 %v779, 7
      %v781 = vsub.s32 2, %v780
      %v782 = vrot.slane %v649, %v781
      %v783 = vlaneseq
      %v784 = vshrl.u32 %v783, 7
      %v785 = vsub.s32 0, %v784
      %v786 = vrot.slane %v657, %v785
      %v787 = vlaneseq
      %v788 = vshrl.u32 %v787, 7
      %v789 = vsub.s32 1, %v788
      %v790 = vrot.slane %v657, %v789
      %v791 = vlaneseq
      %v792 = vshrl.u32 %v791, 7
      %v793 = vsub.s32 2, %v792
      %v794 = vrot.slane %v657, %v793
      %v795 = vlaneseq
      %v796 = vshrl.u32 %v795, 7
      %v797 = vsub.s32 0, %v796
      %v798 = vrot.slane %v659, %v797
      %v799 = vlaneseq
      %v800 = vshrl.u32 %v799, 7
      %v801 = vsub.s32 1, %v800
      %v802 = vrot.slane %v659, %v801
      %v803 = vlaneseq
      %v804 = vshrl.u32 %v803, 7
      %v805 = vsub.s32 2, %v804
      %v806 = vrot.slane %v659, %v805
      %v807 = vlaneseq
      %v808 = vshrl.u32 %v807, 7
      %v809 = vsub.s32 0, %v808
      %v810 = vrot.slane %v642, %v809
      %v811 = vlaneseq
      %v812 = vshrl.u32 %v811, 7
      %v813 = vsub.s32 1, %v812
      %v814 = vrot.slane %v642, %v813
      %v815 = vlaneseq
      %v816 = vshrl.u32 %v815, 7
      %v817 = vsub.s32 2, %v816
      %v818 = vrot.slane %v642, %v817
      %v819 = vlaneseq
      %v820 = vshrl.u32 %v819, 7
      %v821 = vsub.s32 0, %v820
      %v822 = vrot.slane %v656, %v821
      %v823 = vlaneseq
      %v824 = vshrl.u32 %v823, 7
      %v825 = vsub.s32 1, %v824
      %v826 = vrot.slane %v656, %v825
      %v827 = vlaneseq
      %v828 = vshrl.u32 %v827, 7
      %v829 = vsub.s32 2, %v828
      %v830 = vrot.slane %v656, %v829
      %v831 = vlaneseq
      %v832 = vshrl.u32 %v831, 7
      %v833 = vsub.s32 0, %v832
      %v834 = vrot.slane %v658, %v833
      %v835 = vlaneseq
      %v836 = vshrl.u32 %v835, 7
      %v837 = vsub.s32 1, %v836
      %v838 = vrot.slane %v658, %v837
      %v839 = vlaneseq
      %v840 = vshrl.u32 %v839, 7
      %v841 = vsub.s32 2, %v840
      %v842 = vrot.slane %v658, %v841
      %v843 = vlaneseq
      %v844 = vshrl.u32 %v843, 7
      %v845 = vsub.s32 0, %v844
      %v846 = vrot.slane %v660, %v845
      %v847 = vlaneseq
      %v848 = vshrl.u32 %v847, 7
      %v849 = vsub.s32 1, %v848
      %v850 = vrot.slane %v660, %v849
      %v851 = vlaneseq
      %v852 = vshrl.u32 %v851, 7
      %v853 = vsub.s32 2, %v852
      %v854 = vrot.slane %v660, %v853
      %904 = vset.pattern.permute.xlu0 0
      %905 = vperm.xlu0 %904, %v662
      %v906 = vpop.permute.xlu0 %905
      %v908 = vmul.f32 %v666, %v906
      %v909 = vmul.f32 %v670, %v906
      %v910 = vmul.f32 %v674, %v906
      %v911 = vmul.f32 %v678, %v906
      %v912 = vmul.f32 %v682, %v906
      %v913 = vmul.f32 %v686, %v906
      %v914 = vmul.f32 %v690, %v906
      %v915 = vmul.f32 %v694, %v906
      %v916 = vmul.f32 %v698, %v906
      %v917 = vmul.f32 %v702, %v906
      %v918 = vmul.f32 %v706, %v906
      %v919 = vmul.f32 %v710, %v906
      %v920 = vmul.f32 %v714, %v906
      %v921 = vmul.f32 %v718, %v906
      %v922 = vmul.f32 %v722, %v906
      %v923 = vmul.f32 %v726, %v906
      %v924 = vmul.f32 %v730, %v906
      %v925 = vmul.f32 %v734, %v906
      %v926 = vmul.f32 %v738, %v906
      %v927 = vmul.f32 %v742, %v906
      %v928 = vmul.f32 %v746, %v906
      %v929 = vmul.f32 %v750, %v906
      %v930 = vmul.f32 %v754, %v906
      %v931 = vmul.f32 %v758, %v906
      %v932 = vmul.f32 %v762, %v906
      %v933 = vmul.f32 %v766, %v906
      %v934 = vmul.f32 %v770, %v906
      %v935 = vmul.f32 %v774, %v906
      %v936 = vmul.f32 %v778, %v906
      %v937 = vmul.f32 %v782, %v906
      %v938 = vmul.f32 %v786, %v906
      %v939 = vmul.f32 %v790, %v906
      %v940 = vmul.f32 %v794, %v906
      %v941 = vmul.f32 %v798, %v906
      %v942 = vmul.f32 %v802, %v906
      %v943 = vmul.f32 %v806, %v906
      %v944 = vmul.f32 %v810, %v906
      %v945 = vmul.f32 %v814, %v906
      %v946 = vmul.f32 %v818, %v906
      %v947 = vmul.f32 %v822, %v906
      %v948 = vmul.f32 %v826, %v906
      %v949 = vmul.f32 %v830, %v906
      %v950 = vmul.f32 %v834, %v906
      %v951 = vmul.f32 %v838, %v906
      %v952 = vmul.f32 %v842, %v906
      %v953 = vmul.f32 %v846, %v906
      %v954 = vmul.f32 %v850, %v906
      %v955 = vmul.f32 %v854, %v906
      %1004 = vrot.lane.b32.xlu0 %v908, 127
      %v1005 = vpop.permute.xlu0 %1004
      %1006 = vrot.lane.b32.xlu0 %v909, 127
      %v1007 = vpop.permute.xlu0 %1006
      %1008 = vrot.lane.b32.xlu0 %v910, 127
      %v1009 = vpop.permute.xlu0 %1008
      %1010 = vrot.lane.b32.xlu0 %v911, 127
      %v1011 = vpop.permute.xlu0 %1010
      %1012 = vrot.lane.b32.xlu0 %v912, 127
      %v1013 = vpop.permute.xlu0 %1012
      %1014 = vrot.lane.b32.xlu0 %v913, 127
      %v1015 = vpop.permute.xlu0 %1014
      %1016 = vrot.lane.b32.xlu0 %v914, 127
      %v1017 = vpop.permute.xlu0 %1016
      %1018 = vrot.lane.b32.xlu0 %v915, 127
      %v1019 = vpop.permute.xlu0 %1018
      %1020 = vrot.lane.b32.xlu0 %v916, 127
      %v1021 = vpop.permute.xlu0 %1020
      %1022 = vrot.lane.b32.xlu0 %v917, 127
      %v1023 = vpop.permute.xlu0 %1022
      %1024 = vrot.lane.b32.xlu0 %v918, 127
      %v1025 = vpop.permute.xlu0 %1024
      %1026 = vrot.lane.b32.xlu0 %v919, 127
      %v1027 = vpop.permute.xlu0 %1026
      %1028 = vrot.lane.b32.xlu0 %v920, 127
      %v1029 = vpop.permute.xlu0 %1028
      %1030 = vrot.lane.b32.xlu0 %v921, 127
      %v1031 = vpop.permute.xlu0 %1030
      %1032 = vrot.lane.b32.xlu0 %v922, 127
      %v1033 = vpop.permute.xlu0 %1032
      %1034 = vrot.lane.b32.xlu0 %v923, 127
      %v1035 = vpop.permute.xlu0 %1034
      %1036 = vrot.lane.b32.xlu0 %v924, 127
      %v1037 = vpop.permute.xlu0 %1036
      %1038 = vrot.lane.b32.xlu0 %v925, 127
      %v1039 = vpop.permute.xlu0 %1038
      %1040 = vrot.lane.b32.xlu0 %v926, 127
      %v1041 = vpop.permute.xlu0 %1040
      %1042 = vrot.lane.b32.xlu0 %v927, 127
      %v1043 = vpop.permute.xlu0 %1042
      %1044 = vrot.lane.b32.xlu0 %v928, 127
      %v1045 = vpop.permute.xlu0 %1044
      %1046 = vrot.lane.b32.xlu0 %v929, 127
      %v1047 = vpop.permute.xlu0 %1046
      %1048 = vrot.lane.b32.xlu0 %v930, 127
      %v1049 = vpop.permute.xlu0 %1048
      %1050 = vrot.lane.b32.xlu0 %v931, 127
      %v1051 = vpop.permute.xlu0 %1050
      %1052 = vrot.lane.b32.xlu0 %v932, 127
      %v1053 = vpop.permute.xlu0 %1052
      %1054 = vrot.lane.b32.xlu0 %v933, 127
      %v1055 = vpop.permute.xlu0 %1054
      %1056 = vrot.lane.b32.xlu0 %v934, 127
      %v1057 = vpop.permute.xlu0 %1056
      %1058 = vrot.lane.b32.xlu0 %v935, 127
      %v1059 = vpop.permute.xlu0 %1058
      %1060 = vrot.lane.b32.xlu0 %v936, 127
      %v1061 = vpop.permute.xlu0 %1060
      %1062 = vrot.lane.b32.xlu0 %v937, 127
      %v1063 = vpop.permute.xlu0 %1062
      %1064 = vrot.lane.b32.xlu0 %v938, 127
      %v1065 = vpop.permute.xlu0 %1064
      %1066 = vrot.lane.b32.xlu0 %v939, 127
      %v1067 = vpop.permute.xlu0 %1066
      %1068 = vrot.lane.b32.xlu0 %v940, 127
      %v1069 = vpop.permute.xlu0 %1068
      %1070 = vrot.lane.b32.xlu0 %v941, 127
      %v1071 = vpop.permute.xlu0 %1070
      %1072 = vrot.lane.b32.xlu0 %v942, 127
      %v1073 = vpop.permute.xlu0 %1072
      %1074 = vrot.lane.b32.xlu0 %v943, 127
      %v1075 = vpop.permute.xlu0 %1074
      %1076 = vrot.lane.b32.xlu0 %v944, 127
      %v1077 = vpop.permute.xlu0 %1076
      %1078 = vrot.lane.b32.xlu0 %v945, 127
      %v1079 = vpop.permute.xlu0 %1078
      %1080 = vrot.lane.b32.xlu0 %v946, 127
      %v1081 = vpop.permute.xlu0 %1080
      %1082 = vrot.lane.b32.xlu0 %v947, 127
      %v1083 = vpop.permute.xlu0 %1082
      %1084 = vrot.lane.b32.xlu0 %v948, 127
      %v1085 = vpop.permute.xlu0 %1084
      %1086 = vrot.lane.b32.xlu0 %v949, 127
      %v1087 = vpop.permute.xlu0 %1086
      %1088 = vrot.lane.b32.xlu0 %v950, 127
      %v1089 = vpop.permute.xlu0 %1088
      %1090 = vrot.lane.b32.xlu0 %v951, 127
      %v1091 = vpop.permute.xlu0 %1090
      %1092 = vrot.lane.b32.xlu0 %v952, 127
      %v1093 = vpop.permute.xlu0 %1092
      %1094 = vrot.lane.b32.xlu0 %v953, 127
      %v1095 = vpop.permute.xlu0 %1094
      %1096 = vrot.lane.b32.xlu0 %v954, 127
      %v1097 = vpop.permute.xlu0 %1096
      %1098 = vrot.lane.b32.xlu0 %v955, 127
      %v1099 = vpop.permute.xlu0 %1098
      %vm1100 = vcmask 1039360
      %v1101 = vsel %vm1100, %v1005, %v1007
      %v1102 = vsel %vm1100, %v1007, %v1009
      %v1103 = vsel %vm1100, %v1011, %v1013
      %v1104 = vsel %vm1100, %v1013, %v1015
      %v1105 = vsel %vm1100, %v1017, %v1019
      %v1106 = vsel %vm1100, %v1019, %v1021
      %v1107 = vsel %vm1100, %v1023, %v1025
      %v1108 = vsel %vm1100, %v1025, %v1027
      %v1109 = vsel %vm1100, %v1029, %v1031
      %v1110 = vsel %vm1100, %v1031, %v1033
      %v1111 = vsel %vm1100, %v1035, %v1037
      %v1112 = vsel %vm1100, %v1037, %v1039
      %v1113 = vsel %vm1100, %v1041, %v1043
      %v1114 = vsel %vm1100, %v1043, %v1045
      %v1115 = vsel %vm1100, %v1047, %v1049
      %v1116 = vsel %vm1100, %v1049, %v1051
      %v1117 = vsel %vm1100, %v1053, %v1055
      %v1118 = vsel %vm1100, %v1055, %v1057
      %v1119 = vsel %vm1100, %v1059, %v1061
      %v1120 = vsel %vm1100, %v1061, %v1063
      %v1121 = vsel %vm1100, %v1065, %v1067
      %v1122 = vsel %vm1100, %v1067, %v1069
      %v1123 = vsel %vm1100, %v1071, %v1073
      %v1124 = vsel %vm1100, %v1073, %v1075
      %v1125 = vsel %vm1100, %v1077, %v1079
      %v1126 = vsel %vm1100, %v1079, %v1081
      %v1127 = vsel %vm1100, %v1083, %v1085
      %v1128 = vsel %vm1100, %v1085, %v1087
      %v1129 = vsel %vm1100, %v1089, %v1091
      %v1130 = vsel %vm1100, %v1091, %v1093
      %v1131 = vsel %vm1100, %v1095, %v1097
      %v1132 = vsel %vm1100, %v1097, %v1099
      %v1165 = vadd.f32 %v525, %v1101
      %v1166 = vadd.f32 %v526, %v1102
      %v1167 = vadd.f32 %v527, %v1103
      %v1168 = vadd.f32 %v528, %v1104
      %v1169 = vadd.f32 %v529, %v1105
      %v1170 = vadd.f32 %v530, %v1106
      %v1171 = vadd.f32 %v531, %v1107
      %v1172 = vadd.f32 %v532, %v1108
      %v1173 = vadd.f32 %v533, %v1109
      %v1174 = vadd.f32 %v534, %v1110
      %v1175 = vadd.f32 %v535, %v1111
      %v1176 = vadd.f32 %v536, %v1112
      %v1177 = vadd.f32 %v537, %v1113
      %v1178 = vadd.f32 %v538, %v1114
      %v1179 = vadd.f32 %v539, %v1115
      %v1180 = vadd.f32 %v540, %v1116
      %v1181 = vadd.f32 %v541, %v1117
      %v1182 = vadd.f32 %v542, %v1118
      %v1183 = vadd.f32 %v543, %v1119
      %v1184 = vadd.f32 %v544, %v1120
      %v1185 = vadd.f32 %v545, %v1121
      %v1186 = vadd.f32 %v546, %v1122
      %v1187 = vadd.f32 %v547, %v1123
      %v1188 = vadd.f32 %v548, %v1124
      %v1189 = vadd.f32 %v549, %v1125
      %v1190 = vadd.f32 %v550, %v1126
      %v1191 = vadd.f32 %v551, %v1127
      %v1192 = vadd.f32 %v552, %v1128
      %v1193 = vadd.f32 %v553, %v1129
      %v1194 = vadd.f32 %v554, %v1130
      %v1195 = vadd.f32 %v555, %v1131
      %v1196 = vadd.f32 %v556, %v1132
      %s1197 = scalar_lea.vmem %s1, 16
      %v1198 = vld [vmem:[%s1197] sm:$0xff]
      %1200 = vset.pattern.permute.xlu0 0
      %1201 = vperm.xlu0 %1200, %v1198
      %v1202 = vpop.permute.xlu0 %1201
      %v1204 = vmul.f32 %v666, %v1202
      %v1205 = vmul.f32 %v670, %v1202
      %v1206 = vmul.f32 %v674, %v1202
      %v1207 = vmul.f32 %v678, %v1202
      %v1208 = vmul.f32 %v682, %v1202
      %v1209 = vmul.f32 %v686, %v1202
      %v1210 = vmul.f32 %v690, %v1202
      %v1211 = vmul.f32 %v694, %v1202
      %v1212 = vmul.f32 %v698, %v1202
      %v1213 = vmul.f32 %v702, %v1202
      %v1214 = vmul.f32 %v706, %v1202
      %v1215 = vmul.f32 %v710, %v1202
      %v1216 = vmul.f32 %v714, %v1202
      %v1217 = vmul.f32 %v718, %v1202
      %v1218 = vmul.f32 %v722, %v1202
      %v1219 = vmul.f32 %v726, %v1202
      %v1220 = vmul.f32 %v730, %v1202
      %v1221 = vmul.f32 %v734, %v1202
      %v1222 = vmul.f32 %v738, %v1202
      %v1223 = vmul.f32 %v742, %v1202
      %v1224 = vmul.f32 %v746, %v1202
      %v1225 = vmul.f32 %v750, %v1202
      %v1226 = vmul.f32 %v754, %v1202
      %v1227 = vmul.f32 %v758, %v1202
      %v1228 = vmul.f32 %v762, %v1202
      %v1229 = vmul.f32 %v766, %v1202
      %v1230 = vmul.f32 %v770, %v1202
      %v1231 = vmul.f32 %v774, %v1202
      %v1232 = vmul.f32 %v778, %v1202
      %v1233 = vmul.f32 %v782, %v1202
      %v1234 = vmul.f32 %v786, %v1202
      %v1235 = vmul.f32 %v790, %v1202
      %v1236 = vmul.f32 %v794, %v1202
      %v1237 = vmul.f32 %v798, %v1202
      %v1238 = vmul.f32 %v802, %v1202
      %v1239 = vmul.f32 %v806, %v1202
      %v1240 = vmul.f32 %v810, %v1202
      %v1241 = vmul.f32 %v814, %v1202
      %v1242 = vmul.f32 %v818, %v1202
      %v1243 = vmul.f32 %v822, %v1202
      %v1244 = vmul.f32 %v826, %v1202
      %v1245 = vmul.f32 %v830, %v1202
      %v1246 = vmul.f32 %v834, %v1202
      %v1247 = vmul.f32 %v838, %v1202
      %v1248 = vmul.f32 %v842, %v1202
      %v1249 = vmul.f32 %v846, %v1202
      %v1250 = vmul.f32 %v850, %v1202
      %v1251 = vmul.f32 %v854, %v1202
      %1300 = vrot.lane.b32.xlu0 %v1204, 126
      %v1301 = vpop.permute.xlu0 %1300
      %1302 = vrot.lane.b32.xlu0 %v1205, 126
      %v1303 = vpop.permute.xlu0 %1302
      %1304 = vrot.lane.b32.xlu0 %v1206, 126
      %v1305 = vpop.permute.xlu0 %1304
      %1306 = vrot.lane.b32.xlu0 %v1207, 126
      %v1307 = vpop.permute.xlu0 %1306
      %1308 = vrot.lane.b32.xlu0 %v1208, 126
      %v1309 = vpop.permute.xlu0 %1308
      %1310 = vrot.lane.b32.xlu0 %v1209, 126
      %v1311 = vpop.permute.xlu0 %1310
      %1312 = vrot.lane.b32.xlu0 %v1210, 126
      %v1313 = vpop.permute.xlu0 %1312
      %1314 = vrot.lane.b32.xlu0 %v1211, 126
      %v1315 = vpop.permute.xlu0 %1314
      %1316 = vrot.lane.b32.xlu0 %v1212, 126
      %v1317 = vpop.permute.xlu0 %1316
      %1318 = vrot.lane.b32.xlu0 %v1213, 126
      %v1319 = vpop.permute.xlu0 %1318
      %1320 = vrot.lane.b32.xlu0 %v1214, 126
      %v1321 = vpop.permute.xlu0 %1320
      %1322 = vrot.lane.b32.xlu0 %v1215, 126
      %v1323 = vpop.permute.xlu0 %1322
      %1324 = vrot.lane.b32.xlu0 %v1216, 126
      %v1325 = vpop.permute.xlu0 %1324
      %1326 = vrot.lane.b32.xlu0 %v1217, 126
      %v1327 = vpop.permute.xlu0 %1326
      %1328 = vrot.lane.b32.xlu0 %v1218, 126
      %v1329 = vpop.permute.xlu0 %1328
      %1330 = vrot.lane.b32.xlu0 %v1219, 126
      %v1331 = vpop.permute.xlu0 %1330
      %1332 = vrot.lane.b32.xlu0 %v1220, 126
      %v1333 = vpop.permute.xlu0 %1332
      %1334 = vrot.lane.b32.xlu0 %v1221, 126
      %v1335 = vpop.permute.xlu0 %1334
      %1336 = vrot.lane.b32.xlu0 %v1222, 126
      %v1337 = vpop.permute.xlu0 %1336
      %1338 = vrot.lane.b32.xlu0 %v1223, 126
      %v1339 = vpop.permute.xlu0 %1338
      %1340 = vrot.lane.b32.xlu0 %v1224, 126
      %v1341 = vpop.permute.xlu0 %1340
      %1342 = vrot.lane.b32.xlu0 %v1225, 126
      %v1343 = vpop.permute.xlu0 %1342
      %1344 = vrot.lane.b32.xlu0 %v1226, 126
      %v1345 = vpop.permute.xlu0 %1344
      %1346 = vrot.lane.b32.xlu0 %v1227, 126
      %v1347 = vpop.permute.xlu0 %1346
      %1348 = vrot.lane.b32.xlu0 %v1228, 126
      %v1349 = vpop.permute.xlu0 %1348
      %1350 = vrot.lane.b32.xlu0 %v1229, 126
      %v1351 = vpop.permute.xlu0 %1350
      %1352 = vrot.lane.b32.xlu0 %v1230, 126
      %v1353 = vpop.permute.xlu0 %1352
      %1354 = vrot.lane.b32.xlu0 %v1231, 126
      %v1355 = vpop.permute.xlu0 %1354
      %1356 = vrot.lane.b32.xlu0 %v1232, 126
      %v1357 = vpop.permute.xlu0 %1356
      %1358 = vrot.lane.b32.xlu0 %v1233, 126
      %v1359 = vpop.permute.xlu0 %1358
      %1360 = vrot.lane.b32.xlu0 %v1234, 126
      %v1361 = vpop.permute.xlu0 %1360
      %1362 = vrot.lane.b32.xlu0 %v1235, 126
      %v1363 = vpop.permute.xlu0 %1362
      %1364 = vrot.lane.b32.xlu0 %v1236, 126
      %v1365 = vpop.permute.xlu0 %1364
      %1366 = vrot.lane.b32.xlu0 %v1237, 126
      %v1367 = vpop.permute.xlu0 %1366
      %1368 = vrot.lane.b32.xlu0 %v1238, 126
      %v1369 = vpop.permute.xlu0 %1368
      %1370 = vrot.lane.b32.xlu0 %v1239, 126
      %v1371 = vpop.permute.xlu0 %1370
      %1372 = vrot.lane.b32.xlu0 %v1240, 126
      %v1373 = vpop.permute.xlu0 %1372
      %1374 = vrot.lane.b32.xlu0 %v1241, 126
      %v1375 = vpop.permute.xlu0 %1374
      %1376 = vrot.lane.b32.xlu0 %v1242, 126
      %v1377 = vpop.permute.xlu0 %1376
      %1378 = vrot.lane.b32.xlu0 %v1243, 126
      %v1379 = vpop.permute.xlu0 %1378
      %1380 = vrot.lane.b32.xlu0 %v1244, 126
      %v1381 = vpop.permute.xlu0 %1380
      %1382 = vrot.lane.b32.xlu0 %v1245, 126
      %v1383 = vpop.permute.xlu0 %1382
      %1384 = vrot.lane.b32.xlu0 %v1246, 126
      %v1385 = vpop.permute.xlu0 %1384
      %1386 = vrot.lane.b32.xlu0 %v1247, 126
      %v1387 = vpop.permute.xlu0 %1386
      %1388 = vrot.lane.b32.xlu0 %v1248, 126
      %v1389 = vpop.permute.xlu0 %1388
      %1390 = vrot.lane.b32.xlu0 %v1249, 126
      %v1391 = vpop.permute.xlu0 %1390
      %1392 = vrot.lane.b32.xlu0 %v1250, 126
      %v1393 = vpop.permute.xlu0 %1392
      %1394 = vrot.lane.b32.xlu0 %v1251, 126
      %v1395 = vpop.permute.xlu0 %1394
      %vm1396 = vcmask 1031168
      %v1397 = vsel %vm1396, %v1301, %v1303
      %v1398 = vsel %vm1396, %v1303, %v1305
      %v1399 = vsel %vm1396, %v1307, %v1309
      %v1400 = vsel %vm1396, %v1309, %v1311
      %v1401 = vsel %vm1396, %v1313, %v1315
      %v1402 = vsel %vm1396, %v1315, %v1317
      %v1403 = vsel %vm1396, %v1319, %v1321
      %v1404 = vsel %vm1396, %v1321, %v1323
      %v1405 = vsel %vm1396, %v1325, %v1327
      %v1406 = vsel %vm1396, %v1327, %v1329
      %v1407 = vsel %vm1396, %v1331, %v1333
      %v1408 = vsel %vm1396, %v1333, %v1335
      %v1409 = vsel %vm1396, %v1337, %v1339
      %v1410 = vsel %vm1396, %v1339, %v1341
      %v1411 = vsel %vm1396, %v1343, %v1345
      %v1412 = vsel %vm1396, %v1345, %v1347
      %v1413 = vsel %vm1396, %v1349, %v1351
      %v1414 = vsel %vm1396, %v1351, %v1353
      %v1415 = vsel %vm1396, %v1355, %v1357
      %v1416 = vsel %vm1396, %v1357, %v1359
      %v1417 = vsel %vm1396, %v1361, %v1363
      %v1418 = vsel %vm1396, %v1363, %v1365
      %v1419 = vsel %vm1396, %v1367, %v1369
      %v1420 = vsel %vm1396, %v1369, %v1371
      %v1421 = vsel %vm1396, %v1373, %v1375
      %v1422 = vsel %vm1396, %v1375, %v1377
      %v1423 = vsel %vm1396, %v1379, %v1381
      %v1424 = vsel %vm1396, %v1381, %v1383
      %v1425 = vsel %vm1396, %v1385, %v1387
      %v1426 = vsel %vm1396, %v1387, %v1389
      %v1427 = vsel %vm1396, %v1391, %v1393
      %v1428 = vsel %vm1396, %v1393, %v1395
      %v1461 = vadd.f32 %v1165, %v1397
      %v1462 = vadd.f32 %v1166, %v1398
      %v1463 = vadd.f32 %v1167, %v1399
      %v1464 = vadd.f32 %v1168, %v1400
      %v1465 = vadd.f32 %v1169, %v1401
      %v1466 = vadd.f32 %v1170, %v1402
      %v1467 = vadd.f32 %v1171, %v1403
      %v1468 = vadd.f32 %v1172, %v1404
      %v1469 = vadd.f32 %v1173, %v1405
      %v1470 = vadd.f32 %v1174, %v1406
      %v1471 = vadd.f32 %v1175, %v1407
      %v1472 = vadd.f32 %v1176, %v1408
      %v1473 = vadd.f32 %v1177, %v1409
      %v1474 = vadd.f32 %v1178, %v1410
      %v1475 = vadd.f32 %v1179, %v1411
      %v1476 = vadd.f32 %v1180, %v1412
      %v1477 = vadd.f32 %v1181, %v1413
      %v1478 = vadd.f32 %v1182, %v1414
      %v1479 = vadd.f32 %v1183, %v1415
      %v1480 = vadd.f32 %v1184, %v1416
      %v1481 = vadd.f32 %v1185, %v1417
      %v1482 = vadd.f32 %v1186, %v1418
      %v1483 = vadd.f32 %v1187, %v1419
      %v1484 = vadd.f32 %v1188, %v1420
      %v1485 = vadd.f32 %v1189, %v1421
      %v1486 = vadd.f32 %v1190, %v1422
      %v1487 = vadd.f32 %v1191, %v1423
      %v1488 = vadd.f32 %v1192, %v1424
      %v1489 = vadd.f32 %v1193, %v1425
      %v1490 = vadd.f32 %v1194, %v1426
      %v1491 = vadd.f32 %v1195, %v1427
      %v1492 = vadd.f32 %v1196, %v1428
      %1493 = vxpose.xlu0.b32.start [1/16] %v1461, 128
      %1494 = vxpose.xlu0.b32.cont [2/16] %v1463, 128
      %1495 = vxpose.xlu0.b32.cont [3/16] %v1465, 128
      %1496 = vxpose.xlu0.b32.cont [4/16] %v1467, 128
      %1497 = vxpose.xlu0.b32.cont [5/16] %v1469, 128
      %1498 = vxpose.xlu0.b32.cont [6/16] %v1471, 128
      %1499 = vxpose.xlu0.b32.cont [7/16] %v1473, 128
      %1500 = vxpose.xlu0.b32.cont [8/16] %v1475, 128
      %1501 = vxpose.xlu0.b32.cont [9/16] %v1477, 128
      %1502 = vxpose.xlu0.b32.cont [10/16] %v1479, 128
      %1503 = vxpose.xlu0.b32.cont [11/16] %v1481, 128
      %1504 = vxpose.xlu0.b32.cont [12/16] %v1483, 128
      %1505 = vxpose.xlu0.b32.cont [13/16] %v1485, 128
      %1506 = vxpose.xlu0.b32.cont [14/16] %v1487, 128
      %1507 = vxpose.xlu0.b32.cont [15/16] %v1489, 128
      %1508 = vxpose.xlu0.b32.end [16/16] %v1491, 128
      %v1509 = vpop.trf.xlu0
      %v1510 = vpop.trf.xlu0
      %v1511 = vpop.trf.xlu0
      %v1512 = vpop.trf.xlu0
      %v1513 = vpop.trf.xlu0
      %v1514 = vpop.trf.xlu0
      %v1515 = vpop.trf.xlu0
      %v1516 = vpop.trf.xlu0
      %v1517 = vpop.trf.xlu0
      %v1518 = vpop.trf.xlu0
      %v1519 = vpop.trf.xlu0
      %v1520 = vpop.trf.xlu0
      %v1521 = vpop.trf.xlu0
      %v1522 = vpop.trf.xlu0
      %v1523 = vpop.trf.xlu0
      %v1524 = vpop.trf.xlu0
      %1525 = vxpose.xlu0.b32.start [1/16] %v1462, 128
      %1526 = vxpose.xlu0.b32.cont [2/16] %v1464, 128
      %1527 = vxpose.xlu0.b32.cont [3/16] %v1466, 128
      %1528 = vxpose.xlu0.b32.cont [4/16] %v1468, 128
      %1529 = vxpose.xlu0.b32.cont [5/16] %v1470, 128
      %1530 = vxpose.xlu0.b32.cont [6/16] %v1472, 128
      %1531 = vxpose.xlu0.b32.cont [7/16] %v1474, 128
      %1532 = vxpose.xlu0.b32.cont [8/16] %v1476, 128
      %1533 = vxpose.xlu0.b32.cont [9/16] %v1478, 128
      %1534 = vxpose.xlu0.b32.cont [10/16] %v1480, 128
      %1535 = vxpose.xlu0.b32.cont [11/16] %v1482, 128
      %1536 = vxpose.xlu0.b32.cont [12/16] %v1484, 128
      %1537 = vxpose.xlu0.b32.cont [13/16] %v1486, 128
      %1538 = vxpose.xlu0.b32.cont [14/16] %v1488, 128
      %1539 = vxpose.xlu0.b32.cont [15/16] %v1490, 128
      %1540 = vxpose.xlu0.b32.end [16/16] %v1492, 128
      %v1541 = vpop.trf.xlu0
      %v1542 = vpop.trf.xlu0
      %v1543 = vpop.trf.xlu0
      %v1544 = vpop.trf.xlu0
      %v1545 = vpop.trf.xlu0
      %v1546 = vpop.trf.xlu0
      %v1547 = vpop.trf.xlu0
      %v1548 = vpop.trf.xlu0
      %v1549 = vpop.trf.xlu0
      %v1550 = vpop.trf.xlu0
      %v1551 = vpop.trf.xlu0
      %v1552 = vpop.trf.xlu0
      %v1553 = vpop.trf.xlu0
      %v1554 = vpop.trf.xlu0
      %v1555 = vpop.trf.xlu0
      %v1556 = vpop.trf.xlu0
      %1557 = vst [vmem:[%s209] sm:$0xff] %v1509
      %1558 = vst [vmem:[%s209 + $0x8] sm:$0xff] %v1510
      %1559 = vst [vmem:[%s209 + $0x10] sm:$0xff] %v1511
      %1560 = vst [vmem:[%s209 + $0x18] sm:$0xff] %v1512
      %1561 = vst [vmem:[%s209 + $0x20] sm:$0xff] %v1513
      %1562 = vst [vmem:[%s209 + $0x28] sm:$0xff] %v1514
      %1563 = vst [vmem:[%s209 + $0x30] sm:$0xff] %v1515
      %1564 = vst [vmem:[%s209 + $0x38] sm:$0xff] %v1516
      %1565 = vst [vmem:[%s209 + $0x40] sm:$0xff] %v1517
      %1566 = vst [vmem:[%s209 + $0x48] sm:$0xff] %v1518
      %1567 = vst [vmem:[%s209 + $0x50] sm:$0xff] %v1519
      %1568 = vst [vmem:[%s209 + $0x58] sm:$0xff] %v1520
      %1569 = vst [vmem:[%s209 + $0x60] sm:$0xff] %v1521
      %1570 = vst [vmem:[%s209 + $0x68] sm:$0xff] %v1522
      %1571 = vst [vmem:[%s209 + $0x70] sm:$0xff] %v1523
      %1572 = vst [vmem:[%s209 + $0x78] sm:$0xff] %v1524
      %1573 = vst [vmem:[%s209 + $0x80] sm:$0xff] %v1541
      %1574 = vst [vmem:[%s209 + $0x88] sm:$0xff] %v1542
      %1575 = vst [vmem:[%s209 + $0x90] sm:$0xff] %v1543
      %1576 = vst [vmem:[%s209 + $0x98] sm:$0xff] %v1544
      %1577 = vst [vmem:[%s209 + $0xa0] sm:$0xff] %v1545
      %1578 = vst [vmem:[%s209 + $0xa8] sm:$0xff] %v1546
      %1579 = vst [vmem:[%s209 + $0xb0] sm:$0xff] %v1547
      %1580 = vst [vmem:[%s209 + $0xb8] sm:$0xff] %v1548
      %1581 = vst [vmem:[%s209 + $0xc0] sm:$0xff] %v1549
      %1582 = vst [vmem:[%s209 + $0xc8] sm:$0xff] %v1550
      %1583 = vst [vmem:[%s209 + $0xd0] sm:$0xff] %v1551
      %1584 = vst [vmem:[%s209 + $0xd8] sm:$0xff] %v1552
      %1585 = vst [vmem:[%s209 + $0xe0] sm:$0xff] %v1553
      %1586 = vst [vmem:[%s209 + $0xe8] sm:$0xff] %v1554
      %1587 = vst [vmem:[%s209 + $0xf0] sm:$0xff] %v1555
      %1588 = vst [vmem:[%s209 + $0xf8] sm:$0xff] %v1556
      %s1589 = smul.u32 32, %s19
      %p1590 = scmp.lt.s32.totalorder %s1589, 63
      %s1591 = scalar_select %p1590, %s1589, 63
      %p1592 = scmp.lt.s32.totalorder %s18, 0
      %s1593 = scalar_select %p1592, %s18, 0
      %s1594 = sadd.s32 %s1593, %s1591
      %s1595 = smul.addr %s1594, 8
      %s1596 = scalar_lea.vmem %s3, %s1595
      // Predicated region
      $region33: #{conv1d_layer.1} parent=31 // pred_check
        %p1597 = pneg %p116
      $region34: #{conv1d_layer.1} parent=31 // pred_check_branch
        %1599 = sbr.rel (%p1597) target = $region36
      $region35: #{conv1d_layer.1} parent=31 // pred_region
        %s1600 = smul.u32 32, %s19
      $region36: #{conv1d_layer.1} parent=31 // pred_fallthru
        _
    $region32: #{conv1d_layer.1} parent=5 // pred_fallthru
      _
    %p1601 = scmp.le.s32.totalorder 2, %s9
    // Predicated region
    $region37: #{conv1d_layer.1} parent=5 // pred_check
      %p1602 = pneg %p1601
    $region38: #{conv1d_layer.1} parent=5 // pred_check_branch
      %1604 = sbr.rel (%p1602) target = $region40
    $region39: #{conv1d_layer.1} parent=5 // pred_region
      %s1605 = ssub.s32 %s9, 2
      // Predicated region
      $region41: #{conv1d_layer.1} parent=39 // pred_check
        %p1606 = pneg %p122
      $region42: #{conv1d_layer.1} parent=39 // pred_check_branch
        %1608 = sbr.rel (%p1606) target = $region44
      $region43: #{conv1d_layer.1} parent=39 // pred_region
        %s1609 = smul.u32 32, %s21
        %p1610 = scmp.lt.s32.totalorder %s1609, 63
        %s1611 = scalar_select %p1610, %s1609, 63
        %p1612 = scmp.lt.s32.totalorder %s20, 0
        %s1613 = scalar_select %p1612, %s20, 0
        %s1614 = sadd.s32 %s1613, %s1611
        %s1615 = smul.addr %s1614, 8
        %s1616 = scalar_lea.vmem %s3, %s1615
      $region44: #{conv1d_layer.1} parent=39 // pred_fallthru
        _
    $region40: #{conv1d_layer.1} parent=5 // pred_fallthru
      _
  $region6: #{conv1d_layer.1} parent=0 // loop_footer
    %s13 = sadd.s32 1, %s9
  $region7: #{conv1d_layer.1} parent=0 // loop_footer_branch
    %8 = sbr.rel target = $region3
  $region8: #{conv1d_layer.1} parent=0 // loop_exit
    _

</llo_original>
